<compile_context>
chip_gen: v7x
topology: tpu7x:2x2x1
jax: 0.10.0
libtpu: 0.0.40
codegen_flags: <defaults>
</compile_context>

<pallas_src>
import functools

import jax
import jax.numpy as jnp
from jax.experimental import pallas as pl
from jax.experimental.pallas import tpu as pltpu

NUM_MODELS = 4


def _round_up(x, m):
    return ((x + m - 1) // m) * m


def _pad2d(a, rows, cols, dtype):
    """Cast + zero-pad a 2D array only if padding is actually required."""
    a = a.astype(dtype)
    r, c = a.shape
    if r == rows and c == cols:
        return a
    return jnp.pad(a, ((0, rows - r), (0, cols - c)))


def _matmul_bias_kernel(x_ref, w_ref, b_ref, o_ref, acc_ref):
    """One (tm, tn) output tile, accumulated over the K grid axis (last).

    x_ref: (tm, tk) bf16   w_ref: (tk, tn) bf16   b_ref: (1, tn) f32
    o_ref: (tm, tn) f32    acc_ref: (tm, tn) f32 VMEM scratch
    """
    k = pl.program_id(2)

    @pl.when(k == 0)
    def _init():
        acc_ref[...] = jnp.zeros_like(acc_ref)

    acc_ref[...] += jnp.dot(
        x_ref[...], w_ref[...], preferred_element_type=jnp.float32
    )

    @pl.when(k == pl.num_programs(2) - 1)
    def _finalize():
        o_ref[...] = (acc_ref[...] + b_ref[...]).astype(o_ref.dtype)


@functools.partial(jax.jit, static_argnames=("tm_max", "tn_max", "tk_max"))
def ensemble_four(x_nchw, weights, biases, *, tm_max=256, tn_max=256, tk_max=1024):
    """Forward pass of EnsembleFour with four linear sub-models.

    x_nchw : (B, C, H, W) float32
    weights: (4, D_in, D_out)  per-model Linear weights, (in, out) layout
    biases : (4, D_out)        per-model Linear biases
    returns: (B, D_out) float32  == mean_m(x @ W_m + b_m)
    """
    B = x_nchw.shape[0]
    d_in = int(x_nchw.shape[1] * x_nchw.shape[2] * x_nchw.shape[3])
    d_out = weights.shape[-1]

    # ---- one-time glue (plain JAX, fused under jit): ensemble fold ---------
    # Valid because every sub-model is linear: mean over models of affine maps
    # is the affine map of the means. 4x fewer MXU FLOPs and weight bytes.
    w_eff = jnp.mean(weights.astype(jnp.float32), axis=0)        # (D_in, D_out)
    b_eff = jnp.mean(biases.astype(jnp.float32), axis=0)         # (D_out,)

    x2d = x_nchw.reshape(B, d_in)                                 # flatten NCHW

    # ---- tile sizes: MXU / lane friendly, VMEM-bounded ----------------------
    tm = min(tm_max, _round_up(B, 8))          # sublane multiple
    tn = min(tn_max, _round_up(d_out, 128))    # lane-dense output stores
    tk = min(tk_max, _round_up(d_in, 128))

    b_pad = _round_up(B, tm)
    n_pad = _round_up(d_out, tn)
    k_pad = _round_up(d_in, tk)

    # VMEM sanity (double-buffered inputs + f32 acc); shrink tk if oversized.
    def vmem_bytes(tm_, tn_, tk_):
        return 2 * (tm_ * tk_ * 2 + tk_ * tn_ * 2 + tn_ * 4) + tm_ * tn_ * 4
    while tk > 128 and vmem_bytes(tm, tn, tk) > (24 << 20):
        tk //= 2
        k_pad = _round_up(d_in, tk)

    x_p = _pad2d(x2d, b_pad, k_pad, jnp.bfloat16)
    w_p = _pad2d(w_eff, k_pad, n_pad, jnp.bfloat16)
    b_p = _pad2d(b_eff.reshape(1, d_out), 1, n_pad, jnp.float32)

    grid = (b_pad // tm, n_pad // tn, k_pad // tk)

    out_p = pl.pallas_call(
        _matmul_bias_kernel,
        out_shape=jax.ShapeDtypeStruct((b_pad, n_pad), jnp.float32),
        grid_spec=pltpu.PrefetchScalarGridSpec(
            num_scalar_prefetch=0,
            grid=grid,
            in_specs=[
                pl.BlockSpec((tm, tk), lambda i, j, k: (i, k)),   # activations
                pl.BlockSpec((tk, tn), lambda i, j, k: (k, j)),   # fused weights
                pl.BlockSpec((1, tn), lambda i, j, k: (0, j)),    # fused bias
            ],
            out_specs=pl.BlockSpec((tm, tn), lambda i, j, k: (i, j)),
            scratch_shapes=[pltpu.VMEM((tm, tn), jnp.float32)],
        ),
        compiler_params=pltpu.CompilerParams(
            dimension_semantics=("parallel", "parallel", "arbitrary")),
        cost_estimate=pl.CostEstimate(
            flops=2 * b_pad * n_pad * k_pad,
            transcendentals=0,
            bytes_accessed=(b_pad * k_pad * 2 + k_pad * n_pad * 2
                            + b_pad * n_pad * 4),
        ),
    )(x_p, w_p, b_p)

    return out_p[:B, :d_out]


def _reference(x_nchw, weights, biases):
    """Pure-JAX EnsembleFour: average of four independent linear heads (f32)."""
    B = x_nchw.shape[0]
    x2d = x_nchw.reshape(B, -1).astype(jnp.float32)
    outs = [x2d @ weights[m].astype(jnp.float32) + biases[m].astype(jnp.float32)
            for m in range(NUM_MODELS)]
    return sum(outs) / NUM_MODELS


if __name__ == "__main__":
    # Small, deterministic example consistent with an NCHW conv-style input.
    B, C, H, W = 2, 4, 16, 16
    D_in = C * H * W       # 1024
    D_out = 16             # num_classes

    key = jax.random.PRNGKey(0)
    kx, kw, kb = jax.random.split(key, 3)

    x = jax.random.normal(kx, (B, C, H, W), dtype=jnp.float32)
    weights = jax.random.normal(kw, (NUM_MODELS, D_in, D_out),
                                dtype=jnp.float32) * 0.02
    biases = jax.random.normal(kb, (NUM_MODELS, D_out), dtype=jnp.float32) * 0.1

    out = jax.block_until_ready(ensemble_four(x, weights, biases))
    ref = _reference(x, weights, biases)

    assert out.shape == (B, D_out), out.shape
    # bf16 operands in the kernel (f32 accumulation) -> loose tolerance vs f32 ref.
    max_err = jnp.max(jnp.abs(out - ref))
    assert jnp.allclose(out, ref, atol=5e-2, rtol=5e-2), f"max abs err {max_err}"

    print("KERNEL_OK")
</pallas_src>

<mosaic_0001>
module attributes {stable_mosaic.version = 11 : i64} {
  func.func @_matmul_bias_kernel(%arg0: i32, %arg1: i32, %arg2: i32, %arg3: memref<8x1024xbf16, #tpu.memory_space<vmem>>, %arg4: memref<1024x128xbf16, #tpu.memory_space<vmem>>, %arg5: memref<1x128xf32, #tpu.memory_space<vmem>>, %arg6: memref<8x128xf32, #tpu.memory_space<vmem>>, %arg7: memref<8x128xf32, #tpu.memory_space<vmem>>) attributes {dimension_semantics = [#tpu.dimension_semantics<parallel>, #tpu.dimension_semantics<parallel>, #tpu.dimension_semantics<arbitrary>], iteration_bounds = array<i64: 1, 1, 1>, scalar_prefetch = 0 : i64, scratch_operands = 1 : i64, tpu.core_type = #tpu.core_type<tc>, window_params = [{transform_indices = @transform_0, window_bounds = array<i64: 8, 1024>}, {transform_indices = @transform_1, window_bounds = array<i64: 1024, 128>}, {transform_indices = @transform_2, window_bounds = array<i64: 1, 128>}, {transform_indices = @transform_3, window_bounds = array<i64: 8, 128>}]} {
    %c0_i32 = arith.constant 0 : i32
    %0 = arith.cmpi eq, %arg2, %c0_i32 : i32
    %1 = arith.extui %0 : i1 to i32
    %c0_i32_0 = arith.constant 0 : i32
    %2 = arith.cmpi ne, %1, %c0_i32_0 : i32
    scf.if %2 {
      %cst_10 = arith.constant 0.000000e+00 : f32
      %12 = vector.broadcast %cst_10 : f32 to vector<8x128xf32>
      %c0_11 = arith.constant 0 : index
      %c0_12 = arith.constant 0 : index
      %13 = vector.load %arg7[%c0_11, %c0_12] : memref<8x128xf32, #tpu.memory_space<vmem>>, vector<8x128xf32>
      tpu.vector_store %arg7[%c0_11, %c0_12], %12 {strides = array<i32>} : memref<8x128xf32, #tpu.memory_space<vmem>>, vector<8x128xf32>,
    } else {
    }
    %c0 = arith.constant 0 : index
    %c0_1 = arith.constant 0 : index
    %3 = vector.load %arg7[%c0, %c0_1] : memref<8x128xf32, #tpu.memory_space<vmem>>, vector<8x128xf32>
    %c0_2 = arith.constant 0 : index
    %c0_3 = arith.constant 0 : index
    %4 = vector.load %arg3[%c0_2, %c0_3] : memref<8x1024xbf16, #tpu.memory_space<vmem>>, vector<8x1024xbf16>
    %c0_4 = arith.constant 0 : index
    %c0_5 = arith.constant 0 : index
    %5 = vector.load %arg4[%c0_4, %c0_5] : memref<1024x128xbf16, #tpu.memory_space<vmem>>, vector<1024x128xbf16>
    %cst = arith.constant dense<0.000000e+00> : vector<8x128xf32>
    %6 = tpu.matmul %4, %5, %cst {dimension_numbers = #tpu.dot_dimension_numbers<[1], [0], [0], [1], [0, 0, 1, 1], [], []>} : vector<8x1024xbf16>, vector<1024x128xbf16>, vector<8x128xf32> -> vector<8x128xf32>
    %7 = arith.addf %3, %6 : vector<8x128xf32>
    %c0_6 = arith.constant 0 : index
    %c0_7 = arith.constant 0 : index
    %8 = vector.load %arg7[%c0_6, %c0_7] : memref<8x128xf32, #tpu.memory_space<vmem>>, vector<8x128xf32>
    tpu.vector_store %arg7[%c0_6, %c0_7], %7 {strides = array<i32>} : memref<8x128xf32, #tpu.memory_space<vmem>>, vector<8x128xf32>,
    %c0_i32_8 = arith.constant 0 : i32
    %9 = arith.cmpi eq, %arg2, %c0_i32_8 : i32
    %10 = arith.extui %9 : i1 to i32
    %c0_i32_9 = arith.constant 0 : i32
    %11 = arith.cmpi ne, %10, %c0_i32_9 : i32
    scf.if %11 {
      %c0_10 = arith.constant 0 : index
      %c0_11 = arith.constant 0 : index
      %12 = vector.load %arg7[%c0_10, %c0_11] : memref<8x128xf32, #tpu.memory_space<vmem>>, vector<8x128xf32>
      %c0_12 = arith.constant 0 : index
      %c0_13 = arith.constant 0 : index
      %13 = vector.load %arg5[%c0_12, %c0_13] : memref<1x128xf32, #tpu.memory_space<vmem>>, vector<1x128xf32>
      %14 = vector.broadcast %13 : vector<1x128xf32> to vector<8x128xf32>
      %15 = arith.addf %12, %14 : vector<8x128xf32>
      %c0_14 = arith.constant 0 : index
      %c0_15 = arith.constant 0 : index
      %16 = vector.load %arg6[%c0_14, %c0_15] : memref<8x128xf32, #tpu.memory_space<vmem>>, vector<8x128xf32>
      tpu.vector_store %arg6[%c0_14, %c0_15], %15 {strides = array<i32>} : memref<8x128xf32, #tpu.memory_space<vmem>>, vector<8x128xf32>,
    } else {
    }
    return
  }
  func.func @transform_0(%arg0: i32, %arg1: i32, %arg2: i32) -> (i32, i32) {
    %c0_i32 = arith.constant 0 : i32
    return %arg0, %arg2 : i32, i32
  }
  func.func @transform_1(%arg0: i32, %arg1: i32, %arg2: i32) -> (i32, i32) {
    %c0_i32 = arith.constant 0 : i32
    return %arg2, %arg1 : i32, i32
  }
  func.func @transform_2(%arg0: i32, %arg1: i32, %arg2: i32) -> (i32, i32) {
    %c0_i32 = arith.constant 0 : i32
    %c0_i32_0 = arith.constant 0 : i32
    return %c0_i32, %arg1 : i32, i32
  }
  func.func @transform_3(%arg0: i32, %arg1: i32, %arg2: i32) -> (i32, i32) {
    %c0_i32 = arith.constant 0 : i32
    return %arg0, %arg1 : i32, i32
  }
}

</mosaic_0001>

<llo_original>
// kernel: ensemble_four.1
$region0: #{ensemble_four.1}
  #allocation0 [shape = 'u32[]', space=smem, size = 0x4, offset = 0x4, fixed_abs, tag = 'smem constant byte address 0x4 - core index']
  #allocation1 [shape = 'u32[144,128]{1,0:T(1,128)}', space=vmem, size = 0x12000, scoped, tag = 'internal scratch']
  #allocation2 [shape = 'f32[8,128]{1,0:T(8,128)}', space=vmem, size = 0x1000, scoped, tag = 'scratch operand']
  %s0 = inlined_call_operand.vmem [shape: bf16[8,1024], index: 0, kind: input, shape index: {}]
  %s1 = inlined_call_operand.vmem [shape: bf16[1024,128], index: 1, kind: input, shape index: {}]
  %s2 = inlined_call_operand.vmem [shape: f32[1,128], index: 2, kind: input, shape index: {}]
  %s3 = inlined_call_operand.vmem [shape: f32[8,128], index: 3, kind: output, shape index: {}]
  %s4 = sld [smem:[#allocation0]]
  $region30: #{ensemble_four.1} parent=0
    _
  %s6 = ssub.s32 1, %s4
  %s7 = scalar_select 0, %s6, %s4
  // Predicated region
  $region2: #{ensemble_four.1} parent=0 // pred_check
    _
  $region3: #{ensemble_four.1} parent=0 // pred_check_branch
    %9 = sbr.rel (0) target = $region5
  $region4: #{ensemble_four.1} parent=0 // pred_region
    _
  $region5: #{ensemble_four.1} parent=0 // pred_fallthru
    _
  // Predicated region
  $region6: #{ensemble_four.1} parent=0 // pred_check
    _
  $region7: #{ensemble_four.1} parent=0 // pred_check_branch
    %11 = sbr.rel (0) target = $region9
  $region8: #{ensemble_four.1} parent=0 // pred_region
    _
  $region9: #{ensemble_four.1} parent=0 // pred_fallthru
    _
  // Predicated region
  $region10: #{ensemble_four.1} parent=0 // pred_check
    _
  $region11: #{ensemble_four.1} parent=0 // pred_check_branch
    %13 = sbr.rel (0) target = $region13
  $region12: #{ensemble_four.1} parent=0 // pred_region
    _
  $region13: #{ensemble_four.1} parent=0 // pred_fallthru
    _
  %p15 = scmp.eq.s32.totalorder 0, 0
  // Predicated region
  $region14: #{ensemble_four.1} parent=0 // pred_check
    %p16 = pneg %p15
  $region15: #{ensemble_four.1} parent=0 // pred_check_branch
    %18 = sbr.rel (%p16) target = $region17
  $region16: #{ensemble_four.1} parent=0 // pred_region
    %19 = vst [vmem:[#allocation2] sm:$0xff] 0.0
  $region17: #{ensemble_four.1} parent=0 // pred_fallthru
    _
  %v20 = vld [vmem:[#allocation2] sm:$0xff]
  %v21 = vld [vmem:[%s0] sm:$0xff]
  %v22 = vld [vmem:[%s0 + $0x8] sm:$0xff]
  %v23 = vld [vmem:[%s0 + $0x10] sm:$0xff]
  %v24 = vld [vmem:[%s0 + $0x18] sm:$0xff]
  %v25 = vld [vmem:[%s1] sm:$0xf]
  %v26 = vld [vmem:[%s1 + $0x4] sm:$0xf]
  %v27 = vld [vmem:[%s1 + $0x8] sm:$0xf]
  %v28 = vld [vmem:[%s1 + $0xc] sm:$0xf]
  %v29 = vld [vmem:[%s1 + $0x10] sm:$0xf]
  %v30 = vld [vmem:[%s1 + $0x14] sm:$0xf]
  %v31 = vld [vmem:[%s1 + $0x18] sm:$0xf]
  %v32 = vld [vmem:[%s1 + $0x1c] sm:$0xf]
  %v33 = vld [vmem:[%s1 + $0x20] sm:$0xf]
  %v34 = vld [vmem:[%s1 + $0x24] sm:$0xf]
  %v35 = vld [vmem:[%s1 + $0x28] sm:$0xf]
  %v36 = vld [vmem:[%s1 + $0x2c] sm:$0xf]
  %v37 = vld [vmem:[%s1 + $0x30] sm:$0xf]
  %v38 = vld [vmem:[%s1 + $0x34] sm:$0xf]
  %v39 = vld [vmem:[%s1 + $0x38] sm:$0xf]
  %v40 = vld [vmem:[%s1 + $0x3c] sm:$0xf]
  %v41 = vld [vmem:[%s1 + $0x40] sm:$0xf]
  %v42 = vld [vmem:[%s1 + $0x44] sm:$0xf]
  %v43 = vld [vmem:[%s1 + $0x48] sm:$0xf]
  %v44 = vld [vmem:[%s1 + $0x4c] sm:$0xf]
  %v45 = vld [vmem:[%s1 + $0x50] sm:$0xf]
  %v46 = vld [vmem:[%s1 + $0x54] sm:$0xf]
  %v47 = vld [vmem:[%s1 + $0x58] sm:$0xf]
  %v48 = vld [vmem:[%s1 + $0x5c] sm:$0xf]
  %v49 = vld [vmem:[%s1 + $0x60] sm:$0xf]
  %v50 = vld [vmem:[%s1 + $0x64] sm:$0xf]
  %v51 = vld [vmem:[%s1 + $0x68] sm:$0xf]
  %v52 = vld [vmem:[%s1 + $0x6c] sm:$0xf]
  %v53 = vld [vmem:[%s1 + $0x70] sm:$0xf]
  %v54 = vld [vmem:[%s1 + $0x74] sm:$0xf]
  %v55 = vld [vmem:[%s1 + $0x78] sm:$0xf]
  %v56 = vld [vmem:[%s1 + $0x7c] sm:$0xf]
  %v57 = vld [vmem:[%s1 + $0x80] sm:$0xf]
  %v58 = vld [vmem:[%s1 + $0x84] sm:$0xf]
  %v59 = vld [vmem:[%s1 + $0x88] sm:$0xf]
  %v60 = vld [vmem:[%s1 + $0x8c] sm:$0xf]
  %v61 = vld [vmem:[%s1 + $0x90] sm:$0xf]
  %v62 = vld [vmem:[%s1 + $0x94] sm:$0xf]
  %v63 = vld [vmem:[%s1 + $0x98] sm:$0xf]
  %v64 = vld [vmem:[%s1 + $0x9c] sm:$0xf]
  %v65 = vld [vmem:[%s1 + $0xa0] sm:$0xf]
  %v66 = vld [vmem:[%s1 + $0xa4] sm:$0xf]
  %v67 = vld [vmem:[%s1 + $0xa8] sm:$0xf]
  %v68 = vld [vmem:[%s1 + $0xac] sm:$0xf]
  %v69 = vld [vmem:[%s1 + $0xb0] sm:$0xf]
  %v70 = vld [vmem:[%s1 + $0xb4] sm:$0xf]
  %v71 = vld [vmem:[%s1 + $0xb8] sm:$0xf]
  %v72 = vld [vmem:[%s1 + $0xbc] sm:$0xf]
  %v73 = vld [vmem:[%s1 + $0xc0] sm:$0xf]
  %v74 = vld [vmem:[%s1 + $0xc4] sm:$0xf]
  %v75 = vld [vmem:[%s1 + $0xc8] sm:$0xf]
  %v76 = vld [vmem:[%s1 + $0xcc] sm:$0xf]
  %v77 = vld [vmem:[%s1 + $0xd0] sm:$0xf]
  %v78 = vld [vmem:[%s1 + $0xd4] sm:$0xf]
  %v79 = vld [vmem:[%s1 + $0xd8] sm:$0xf]
  %v80 = vld [vmem:[%s1 + $0xdc] sm:$0xf]
  %v81 = vld [vmem:[%s1 + $0xe0] sm:$0xf]
  %v82 = vld [vmem:[%s1 + $0xe4] sm:$0xf]
  %v83 = vld [vmem:[%s1 + $0xe8] sm:$0xf]
  %v84 = vld [vmem:[%s1 + $0xec] sm:$0xf]
  %v85 = vld [vmem:[%s1 + $0xf0] sm:$0xf]
  %v86 = vld [vmem:[%s1 + $0xf4] sm:$0xf]
  %v87 = vld [vmem:[%s1 + $0xf8] sm:$0xf]
  %v88 = vld [vmem:[%s1 + $0xfc] sm:$0xf]
  %v89 = vld [vmem:[%s1 + $0x100] sm:$0xf]
  %v90 = vld [vmem:[%s1 + $0x104] sm:$0xf]
  %v91 = vld [vmem:[%s1 + $0x108] sm:$0xf]
  %v92 = vld [vmem:[%s1 + $0x10c] sm:$0xf]
  %v93 = vld [vmem:[%s1 + $0x110] sm:$0xf]
  %v94 = vld [vmem:[%s1 + $0x114] sm:$0xf]
  %v95 = vld [vmem:[%s1 + $0x118] sm:$0xf]
  %v96 = vld [vmem:[%s1 + $0x11c] sm:$0xf]
  %v97 = vld [vmem:[%s1 + $0x120] sm:$0xf]
  %v98 = vld [vmem:[%s1 + $0x124] sm:$0xf]
  %v99 = vld [vmem:[%s1 + $0x128] sm:$0xf]
  %v100 = vld [vmem:[%s1 + $0x12c] sm:$0xf]
  %v101 = vld [vmem:[%s1 + $0x130] sm:$0xf]
  %v102 = vld [vmem:[%s1 + $0x134] sm:$0xf]
  %v103 = vld [vmem:[%s1 + $0x138] sm:$0xf]
  %v104 = vld [vmem:[%s1 + $0x13c] sm:$0xf]
  %v105 = vld [vmem:[%s1 + $0x140] sm:$0xf]
  %v106 = vld [vmem:[%s1 + $0x144] sm:$0xf]
  %v107 = vld [vmem:[%s1 + $0x148] sm:$0xf]
  %v108 = vld [vmem:[%s1 + $0x14c] sm:$0xf]
  %v109 = vld [vmem:[%s1 + $0x150] sm:$0xf]
  %v110 = vld [vmem:[%s1 + $0x154] sm:$0xf]
  %v111 = vld [vmem:[%s1 + $0x158] sm:$0xf]
  %v112 = vld [vmem:[%s1 + $0x15c] sm:$0xf]
  %v113 = vld [vmem:[%s1 + $0x160] sm:$0xf]
  %v114 = vld [vmem:[%s1 + $0x164] sm:$0xf]
  %v115 = vld [vmem:[%s1 + $0x168] sm:$0xf]
  %v116 = vld [vmem:[%s1 + $0x16c] sm:$0xf]
  %v117 = vld [vmem:[%s1 + $0x170] sm:$0xf]
  %v118 = vld [vmem:[%s1 + $0x174] sm:$0xf]
  %v119 = vld [vmem:[%s1 + $0x178] sm:$0xf]
  %v120 = vld [vmem:[%s1 + $0x17c] sm:$0xf]
  %v121 = vld [vmem:[%s1 + $0x180] sm:$0xf]
  %v122 = vld [vmem:[%s1 + $0x184] sm:$0xf]
  %v123 = vld [vmem:[%s1 + $0x188] sm:$0xf]
  %v124 = vld [vmem:[%s1 + $0x18c] sm:$0xf]
  %v125 = vld [vmem:[%s1 + $0x190] sm:$0xf]
  %v126 = vld [vmem:[%s1 + $0x194] sm:$0xf]
  %v127 = vld [vmem:[%s1 + $0x198] sm:$0xf]
  %v128 = vld [vmem:[%s1 + $0x19c] sm:$0xf]
  %v129 = vld [vmem:[%s1 + $0x1a0] sm:$0xf]
  %v130 = vld [vmem:[%s1 + $0x1a4] sm:$0xf]
  %v131 = vld [vmem:[%s1 + $0x1a8] sm:$0xf]
  %v132 = vld [vmem:[%s1 + $0x1ac] sm:$0xf]
  %v133 = vld [vmem:[%s1 + $0x1b0] sm:$0xf]
  %v134 = vld [vmem:[%s1 + $0x1b4] sm:$0xf]
  %v135 = vld [vmem:[%s1 + $0x1b8] sm:$0xf]
  %v136 = vld [vmem:[%s1 + $0x1bc] sm:$0xf]
  %v137 = vld [vmem:[%s1 + $0x1c0] sm:$0xf]
  %v138 = vld [vmem:[%s1 + $0x1c4] sm:$0xf]
  %v139 = vld [vmem:[%s1 + $0x1c8] sm:$0xf]
  %v140 = vld [vmem:[%s1 + $0x1cc] sm:$0xf]
  %v141 = vld [vmem:[%s1 + $0x1d0] sm:$0xf]
  %v142 = vld [vmem:[%s1 + $0x1d4] sm:$0xf]
  %v143 = vld [vmem:[%s1 + $0x1d8] sm:$0xf]
  %v144 = vld [vmem:[%s1 + $0x1dc] sm:$0xf]
  %v145 = vld [vmem:[%s1 + $0x1e0] sm:$0xf]
  %v146 = vld [vmem:[%s1 + $0x1e4] sm:$0xf]
  %v147 = vld [vmem:[%s1 + $0x1e8] sm:$0xf]
  %v148 = vld [vmem:[%s1 + $0x1ec] sm:$0xf]
  %v149 = vld [vmem:[%s1 + $0x1f0] sm:$0xf]
  %v150 = vld [vmem:[%s1 + $0x1f4] sm:$0xf]
  %v151 = vld [vmem:[%s1 + $0x1f8] sm:$0xf]
  %v152 = vld [vmem:[%s1 + $0x1fc] sm:$0xf]
  %v157 = vunpack.c.l.b16 %v21
  %v158 = vunpack.c.h.b16 %v21
  %v159 = vunpack.c.l.b16 %v22
  %v160 = vunpack.c.h.b16 %v22
  %v161 = vunpack.c.l.b16 %v23
  %v162 = vunpack.c.h.b16 %v23
  %v163 = vunpack.c.l.b16 %v24
  %v164 = vunpack.c.h.b16 %v24
  %v165 = vpack.c.b16 %v157, %v157
  %v166 = vpack.c.b16 %v158, %v158
  %v167 = vpack.c.b16 %v159, %v159
  %v168 = vpack.c.b16 %v160, %v160
  %v169 = vpack.c.b16 %v161, %v161
  %v170 = vpack.c.b16 %v162, %v162
  %v171 = vpack.c.b16 %v163, %v163
  %v172 = vpack.c.b16 %v164, %v164
  %v309 = vunpack.c.l.b16 %v25
  %v310 = vunpack.c.l.b16 %v26
  %v311 = vunpack.c.l.b16 %v27
  %v312 = vunpack.c.l.b16 %v28
  %v313 = vunpack.c.l.b16 %v29
  %v314 = vunpack.c.l.b16 %v30
  %v315 = vunpack.c.l.b16 %v31
  %v316 = vunpack.c.l.b16 %v32
  %v317 = vunpack.c.l.b16 %v33
  %v318 = vunpack.c.l.b16 %v34
  %v319 = vunpack.c.l.b16 %v35
  %v320 = vunpack.c.l.b16 %v36
  %v321 = vunpack.c.l.b16 %v37
  %v322 = vunpack.c.l.b16 %v38
  %v323 = vunpack.c.l.b16 %v39
  %v324 = vunpack.c.l.b16 %v40
  %v325 = vunpack.c.l.b16 %v41
  %v326 = vunpack.c.l.b16 %v42
  %v327 = vunpack.c.l.b16 %v43
  %v328 = vunpack.c.l.b16 %v44
  %v329 = vunpack.c.l.b16 %v45
  %v330 = vunpack.c.l.b16 %v46
  %v331 = vunpack.c.l.b16 %v47
  %v332 = vunpack.c.l.b16 %v48
  %v333 = vunpack.c.l.b16 %v49
  %v334 = vunpack.c.l.b16 %v50
  %v335 = vunpack.c.l.b16 %v51
  %v336 = vunpack.c.l.b16 %v52
  %v337 = vunpack.c.l.b16 %v53
  %v338 = vunpack.c.l.b16 %v54
  %v339 = vunpack.c.l.b16 %v55
  %v340 = vunpack.c.l.b16 %v56
  %v341 = vunpack.c.l.b16 %v57
  %v342 = vunpack.c.l.b16 %v58
  %v343 = vunpack.c.l.b16 %v59
  %v344 = vunpack.c.l.b16 %v60
  %v345 = vunpack.c.l.b16 %v61
  %v346 = vunpack.c.l.b16 %v62
  %v347 = vunpack.c.l.b16 %v63
  %v348 = vunpack.c.l.b16 %v64
  %v349 = vunpack.c.l.b16 %v65
  %v350 = vunpack.c.l.b16 %v66
  %v351 = vunpack.c.l.b16 %v67
  %v352 = vunpack.c.l.b16 %v68
  %v353 = vunpack.c.l.b16 %v69
  %v354 = vunpack.c.l.b16 %v70
  %v355 = vunpack.c.l.b16 %v71
  %v356 = vunpack.c.l.b16 %v72
  %v357 = vunpack.c.l.b16 %v73
  %v358 = vunpack.c.l.b16 %v74
  %v359 = vunpack.c.l.b16 %v75
  %v360 = vunpack.c.l.b16 %v76
  %v361 = vunpack.c.l.b16 %v77
  %v362 = vunpack.c.l.b16 %v78
  %v363 = vunpack.c.l.b16 %v79
  %v364 = vunpack.c.l.b16 %v80
  %v365 = vunpack.c.l.b16 %v81
  %v366 = vunpack.c.l.b16 %v82
  %v367 = vunpack.c.l.b16 %v83
  %v368 = vunpack.c.l.b16 %v84
  %v369 = vunpack.c.l.b16 %v85
  %v370 = vunpack.c.l.b16 %v86
  %v371 = vunpack.c.l.b16 %v87
  %v372 = vunpack.c.l.b16 %v88
  %v373 = vunpack.c.l.b16 %v89
  %v374 = vunpack.c.l.b16 %v90
  %v375 = vunpack.c.l.b16 %v91
  %v376 = vunpack.c.l.b16 %v92
  %v377 = vunpack.c.l.b16 %v93
  %v378 = vunpack.c.l.b16 %v94
  %v379 = vunpack.c.l.b16 %v95
  %v380 = vunpack.c.l.b16 %v96
  %v381 = vunpack.c.l.b16 %v97
  %v382 = vunpack.c.l.b16 %v98
  %v383 = vunpack.c.l.b16 %v99
  %v384 = vunpack.c.l.b16 %v100
  %v385 = vunpack.c.l.b16 %v101
  %v386 = vunpack.c.l.b16 %v102
  %v387 = vunpack.c.l.b16 %v103
  %v388 = vunpack.c.l.b16 %v104
  %v389 = vunpack.c.l.b16 %v105
  %v390 = vunpack.c.l.b16 %v106
  %v391 = vunpack.c.l.b16 %v107
  %v392 = vunpack.c.l.b16 %v108
  %v393 = vunpack.c.l.b16 %v109
  %v394 = vunpack.c.l.b16 %v110
  %v395 = vunpack.c.l.b16 %v111
  %v396 = vunpack.c.l.b16 %v112
  %v397 = vunpack.c.l.b16 %v113
  %v398 = vunpack.c.l.b16 %v114
  %v399 = vunpack.c.l.b16 %v115
  %v400 = vunpack.c.l.b16 %v116
  %v401 = vunpack.c.l.b16 %v117
  %v402 = vunpack.c.l.b16 %v118
  %v403 = vunpack.c.l.b16 %v119
  %v404 = vunpack.c.l.b16 %v120
  %v405 = vunpack.c.l.b16 %v121
  %v406 = vunpack.c.l.b16 %v122
  %v407 = vunpack.c.l.b16 %v123
  %v408 = vunpack.c.l.b16 %v124
  %v409 = vunpack.c.l.b16 %v125
  %v410 = vunpack.c.l.b16 %v126
  %v411 = vunpack.c.l.b16 %v127
  %v412 = vunpack.c.l.b16 %v128
  %v413 = vunpack.c.l.b16 %v129
  %v414 = vunpack.c.l.b16 %v130
  %v415 = vunpack.c.l.b16 %v131
  %v416 = vunpack.c.l.b16 %v132
  %v417 = vunpack.c.l.b16 %v133
  %v418 = vunpack.c.l.b16 %v134
  %v419 = vunpack.c.l.b16 %v135
  %v420 = vunpack.c.l.b16 %v136
  %v421 = vunpack.c.l.b16 %v137
  %v422 = vunpack.c.l.b16 %v138
  %v423 = vunpack.c.l.b16 %v139
  %v424 = vunpack.c.l.b16 %v140
  %v425 = vunpack.c.l.b16 %v141
  %v426 = vunpack.c.l.b16 %v142
  %v427 = vunpack.c.l.b16 %v143
  %v428 = vunpack.c.l.b16 %v144
  %v429 = vunpack.c.l.b16 %v145
  %v430 = vunpack.c.l.b16 %v146
  %v431 = vunpack.c.l.b16 %v147
  %v432 = vunpack.c.l.b16 %v148
  %v433 = vunpack.c.l.b16 %v149
  %v434 = vunpack.c.l.b16 %v150
  %v435 = vunpack.c.l.b16 %v151
  %v436 = vunpack.c.l.b16 %v152
  %v437 = vpack.c.b16 %v310, %v309
  %v438 = vpack.c.b16 %v312, %v311
  %v439 = vpack.c.b16 %v314, %v313
  %v440 = vpack.c.b16 %v316, %v315
  %v441 = vpack.c.b16 %v318, %v317
  %v442 = vpack.c.b16 %v320, %v319
  %v443 = vpack.c.b16 %v322, %v321
  %v444 = vpack.c.b16 %v324, %v323
  %v445 = vpack.c.b16 %v326, %v325
  %v446 = vpack.c.b16 %v328, %v327
  %v447 = vpack.c.b16 %v330, %v329
  %v448 = vpack.c.b16 %v332, %v331
  %v449 = vpack.c.b16 %v334, %v333
  %v450 = vpack.c.b16 %v336, %v335
  %v451 = vpack.c.b16 %v338, %v337
  %v452 = vpack.c.b16 %v340, %v339
  %v453 = vpack.c.b16 %v342, %v341
  %v454 = vpack.c.b16 %v344, %v343
  %v455 = vpack.c.b16 %v346, %v345
  %v456 = vpack.c.b16 %v348, %v347
  %v457 = vpack.c.b16 %v350, %v349
  %v458 = vpack.c.b16 %v352, %v351
  %v459 = vpack.c.b16 %v354, %v353
  %v460 = vpack.c.b16 %v356, %v355
  %v461 = vpack.c.b16 %v358, %v357
  %v462 = vpack.c.b16 %v360, %v359
  %v463 = vpack.c.b16 %v362, %v361
  %v464 = vpack.c.b16 %v364, %v363
  %v465 = vpack.c.b16 %v366, %v365
  %v466 = vpack.c.b16 %v368, %v367
  %v467 = vpack.c.b16 %v370, %v369
  %v468 = vpack.c.b16 %v372, %v371
  %v469 = vpack.c.b16 %v374, %v373
  %v470 = vpack.c.b16 %v376, %v375
  %v471 = vpack.c.b16 %v378, %v377
  %v472 = vpack.c.b16 %v380, %v379
  %v473 = vpack.c.b16 %v382, %v381
  %v474 = vpack.c.b16 %v384, %v383
  %v475 = vpack.c.b16 %v386, %v385
  %v476 = vpack.c.b16 %v388, %v387
  %v477 = vpack.c.b16 %v390, %v389
  %v478 = vpack.c.b16 %v392, %v391
  %v479 = vpack.c.b16 %v394, %v393
  %v480 = vpack.c.b16 %v396, %v395
  %v481 = vpack.c.b16 %v398, %v397
  %v482 = vpack.c.b16 %v400, %v399
  %v483 = vpack.c.b16 %v402, %v401
  %v484 = vpack.c.b16 %v404, %v403
  %v485 = vpack.c.b16 %v406, %v405
  %v486 = vpack.c.b16 %v408, %v407
  %v487 = vpack.c.b16 %v410, %v409
  %v488 = vpack.c.b16 %v412, %v411
  %v489 = vpack.c.b16 %v414, %v413
  %v490 = vpack.c.b16 %v416, %v415
  %v491 = vpack.c.b16 %v418, %v417
  %v492 = vpack.c.b16 %v420, %v419
  %v493 = vpack.c.b16 %v422, %v421
  %v494 = vpack.c.b16 %v424, %v423
  %v495 = vpack.c.b16 %v426, %v425
  %v496 = vpack.c.b16 %v428, %v427
  %v497 = vpack.c.b16 %v430, %v429
  %v498 = vpack.c.b16 %v432, %v431
  %v499 = vpack.c.b16 %v434, %v433
  %v500 = vpack.c.b16 %v436, %v435
  %565 = vmatprep.subr.bf16.mxu0 0
  %566 = vmatpush1.bf16.msra.mxu0 %v437
  %567 = vmatprep.subr.bf16.mxu0 0
  %568 = vmatpush1.bf16.msra.mxu0 %v438
  %569 = vmatprep.subr.bf16.mxu0 0
  %570 = vmatpush1.bf16.msra.mxu0 %v439
  %571 = vmatprep.subr.bf16.mxu0 0
  %572 = vmatpush1.bf16.msra.mxu0 %v440
  %573 = vmatprep.subr.bf16.mxu0 0
  %574 = vmatpush1.bf16.msra.mxu0 %v441
  %575 = vmatprep.subr.bf16.mxu0 0
  %576 = vmatpush1.bf16.msra.mxu0 %v442
  %577 = vmatprep.subr.bf16.mxu0 0
  %578 = vmatpush1.bf16.msra.mxu0 %v443
  %579 = vmatprep.subr.bf16.mxu0 0
  %580 = vmatpush1.bf16.msra.mxu0 %v444
  %581 = vmatprep.subr.bf16.mxu0 0
  %582 = vmatpush1.bf16.msra.mxu0 %v445
  %583 = vmatprep.subr.bf16.mxu0 0
  %584 = vmatpush1.bf16.msra.mxu0 %v446
  %585 = vmatprep.subr.bf16.mxu0 0
  %586 = vmatpush1.bf16.msra.mxu0 %v447
  %587 = vmatprep.subr.bf16.mxu0 0
  %588 = vmatpush1.bf16.msra.mxu0 %v448
  %589 = vmatprep.subr.bf16.mxu0 0
  %590 = vmatpush1.bf16.msra.mxu0 %v449
  %591 = vmatprep.subr.bf16.mxu0 0
  %592 = vmatpush1.bf16.msra.mxu0 %v450
  %593 = vmatprep.subr.bf16.mxu0 0
  %594 = vmatpush1.bf16.msra.mxu0 %v451
  %595 = vmatprep.subr.bf16.mxu0 0
  %596 = vmatpush1.bf16.msra.mxu0 %v452
  %597 = vmatprep.mubr.bf16.mxu0 %v166
  %598 = vmatmul.mubr.bf16.gmra.mrb[0].mxu0 %v165
  %v599 = vpop.f32.mrb[0].mxu0
  %v600 = vadd.f32 0.0, %v599
  %v601 = vpop.f32.mrb[0].mxu0
  %v602 = vpop.f32.mrb[0].mxu0
  %v603 = vpop.f32.mrb[0].mxu0
  %604 = vdwg.mxu0
  %605 = vmatprep.subr.bf16.mxu0 0
  %606 = vmatpush1.bf16.msra.mxu0 %v453
  %607 = vmatprep.subr.bf16.mxu0 0
  %608 = vmatpush1.bf16.msra.mxu0 %v454
  %609 = vmatprep.subr.bf16.mxu0 0
  %610 = vmatpush1.bf16.msra.mxu0 %v455
  %611 = vmatprep.subr.bf16.mxu0 0
  %612 = vmatpush1.bf16.msra.mxu0 %v456
  %613 = vmatprep.subr.bf16.mxu0 0
  %614 = vmatpush1.bf16.msra.mxu0 %v457
  %615 = vmatprep.subr.bf16.mxu0 0
  %616 = vmatpush1.bf16.msra.mxu0 %v458
  %617 = vmatprep.subr.bf16.mxu0 0
  %618 = vmatpush1.bf16.msra.mxu0 %v459
  %619 = vmatprep.subr.bf16.mxu0 0
  %620 = vmatpush1.bf16.msra.mxu0 %v460
  %621 = vmatprep.subr.bf16.mxu0 0
  %622 = vmatpush1.bf16.msra.mxu0 %v461
  %623 = vmatprep.subr.bf16.mxu0 0
  %624 = vmatpush1.bf16.msra.mxu0 %v462
  %625 = vmatprep.subr.bf16.mxu0 0
  %626 = vmatpush1.bf16.msra.mxu0 %v463
  %627 = vmatprep.subr.bf16.mxu0 0
  %628 = vmatpush1.bf16.msra.mxu0 %v464
  %629 = vmatprep.subr.bf16.mxu0 0
  %630 = vmatpush1.bf16.msra.mxu0 %v465
  %631 = vmatprep.subr.bf16.mxu0 0
  %632 = vmatpush1.bf16.msra.mxu0 %v466
  %633 = vmatprep.subr.bf16.mxu0 0
  %634 = vmatpush1.bf16.msra.mxu0 %v467
  %635 = vmatprep.subr.bf16.mxu0 0
  %636 = vmatpush1.bf16.msra.mxu0 %v468
  %637 = vmatprep.mubr.bf16.mxu0 %v168
  %638 = vmatmul.mubr.bf16.gmra.mrb[0].mxu0 %v167
  %v639 = vpop.f32.mrb[0].mxu0
  %v640 = vadd.f32 %v600, %v639
  %v641 = vpop.f32.mrb[0].mxu0
  %v642 = vpop.f32.mrb[0].mxu0
  %v643 = vpop.f32.mrb[0].mxu0
  %644 = vdwg.mxu0
  %645 = vmatprep.subr.bf16.mxu0 0
  %646 = vmatpush1.bf16.msra.mxu0 %v469
  %647 = vmatprep.subr.bf16.mxu0 0
  %648 = vmatpush1.bf16.msra.mxu0 %v470
  %649 = vmatprep.subr.bf16.mxu0 0
  %650 = vmatpush1.bf16.msra.mxu0 %v471
  %651 = vmatprep.subr.bf16.mxu0 0
  %652 = vmatpush1.bf16.msra.mxu0 %v472
  %653 = vmatprep.subr.bf16.mxu0 0
  %654 = vmatpush1.bf16.msra.mxu0 %v473
  %655 = vmatprep.subr.bf16.mxu0 0
  %656 = vmatpush1.bf16.msra.mxu0 %v474
  %657 = vmatprep.subr.bf16.mxu0 0
  %658 = vmatpush1.bf16.msra.mxu0 %v475
  %659 = vmatprep.subr.bf16.mxu0 0
  %660 = vmatpush1.bf16.msra.mxu0 %v476
  %661 = vmatprep.subr.bf16.mxu0 0
  %662 = vmatpush1.bf16.msra.mxu0 %v477
  %663 = vmatprep.subr.bf16.mxu0 0
  %664 = vmatpush1.bf16.msra.mxu0 %v478
  %665 = vmatprep.subr.bf16.mxu0 0
  %666 = vmatpush1.bf16.msra.mxu0 %v479
  %667 = vmatprep.subr.bf16.mxu0 0
  %668 = vmatpush1.bf16.msra.mxu0 %v480
  %669 = vmatprep.subr.bf16.mxu0 0
  %670 = vmatpush1.bf16.msra.mxu0 %v481
  %671 = vmatprep.subr.bf16.mxu0 0
  %672 = vmatpush1.bf16.msra.mxu0 %v482
  %673 = vmatprep.subr.bf16.mxu0 0
  %674 = vmatpush1.bf16.msra.mxu0 %v483
  %675 = vmatprep.subr.bf16.mxu0 0
  %676 = vmatpush1.bf16.msra.mxu0 %v484
  %677 = vmatprep.mubr.bf16.mxu0 %v170
  %678 = vmatmul.mubr.bf16.gmra.mrb[0].mxu0 %v169
  %v679 = vpop.f32.mrb[0].mxu0
  %v680 = vadd.f32 %v640, %v679
  %v681 = vpop.f32.mrb[0].mxu0
  %v682 = vpop.f32.mrb[0].mxu0
  %v683 = vpop.f32.mrb[0].mxu0
  %684 = vdwg.mxu0
  %685 = vmatprep.subr.bf16.mxu0 0
  %686 = vmatpush1.bf16.msra.mxu0 %v485
  %687 = vmatprep.subr.bf16.mxu0 0
  %688 = vmatpush1.bf16.msra.mxu0 %v486
  %689 = vmatprep.subr.bf16.mxu0 0
  %690 = vmatpush1.bf16.msra.mxu0 %v487
  %691 = vmatprep.subr.bf16.mxu0 0
  %692 = vmatpush1.bf16.msra.mxu0 %v488
  %693 = vmatprep.subr.bf16.mxu0 0
  %694 = vmatpush1.bf16.msra.mxu0 %v489
  %695 = vmatprep.subr.bf16.mxu0 0
  %696 = vmatpush1.bf16.msra.mxu0 %v490
  %697 = vmatprep.subr.bf16.mxu0 0
  %698 = vmatpush1.bf16.msra.mxu0 %v491
  %699 = vmatprep.subr.bf16.mxu0 0
  %700 = vmatpush1.bf16.msra.mxu0 %v492
  %701 = vmatprep.subr.bf16.mxu0 0
  %702 = vmatpush1.bf16.msra.mxu0 %v493
  %703 = vmatprep.subr.bf16.mxu0 0
  %704 = vmatpush1.bf16.msra.mxu0 %v494
  %705 = vmatprep.subr.bf16.mxu0 0
  %706 = vmatpush1.bf16.msra.mxu0 %v495
  %707 = vmatprep.subr.bf16.mxu0 0
  %708 = vmatpush1.bf16.msra.mxu0 %v496
  %709 = vmatprep.subr.bf16.mxu0 0
  %710 = vmatpush1.bf16.msra.mxu0 %v497
  %711 = vmatprep.subr.bf16.mxu0 0
  %712 = vmatpush1.bf16.msra.mxu0 %v498
  %713 = vmatprep.subr.bf16.mxu0 0
  %714 = vmatpush1.bf16.msra.mxu0 %v499
  %715 = vmatprep.subr.bf16.mxu0 0
  %716 = vmatpush1.bf16.msra.mxu0 %v500
  %717 = vmatprep.mubr.bf16.mxu0 %v172
  %718 = vmatmul.mubr.bf16.gmra.mrb[0].mxu0 %v171
  %v719 = vpop.f32.mrb[0].mxu0
  %v720 = vadd.f32 %v680, %v719
  %v721 = vpop.f32.mrb[0].mxu0
  %v722 = vpop.f32.mrb[0].mxu0
  %v723 = vpop.f32.mrb[0].mxu0
  %724 = vdwg.mxu0
  %v725 = vadd.f32 %v20, %v720
  %726 = vst [vmem:[#allocation2] sm:$0xff] %v725
  // Predicated region
  $region18: #{ensemble_four.1} parent=0 // pred_check
    %p727 = pneg %p15
  $region19: #{ensemble_four.1} parent=0 // pred_check_branch
    %729 = sbr.rel (%p727) target = $region21
  $region20: #{ensemble_four.1} parent=0 // pred_region
    %v730 = vld [vmem:[#allocation2] sm:$0xff]
    %v731 = vld [vmem:[%s2] sm:$0x1]
    %v733 = vlaneseq
    %v734 = vshrl.u32 %v733, 7
    %v735 = vsub.s32 0, %v734
    %v736 = vrot.slane %v731, %v735
    %v738 = vadd.f32 %v730, %v736
    %739 = vst [vmem:[%s3] sm:$0xff] %v738
  $region21: #{ensemble_four.1} parent=0 // pred_fallthru
    _
  // Predicated region
  $region22: #{ensemble_four.1} parent=0 // pred_check
    _
  $region23: #{ensemble_four.1} parent=0 // pred_check_branch
    %741 = sbr.rel (0) target = $region25
  $region24: #{ensemble_four.1} parent=0 // pred_region
    _
  $region25: #{ensemble_four.1} parent=0 // pred_fallthru
    _
  // Predicated region
  $region26: #{ensemble_four.1} parent=0 // pred_check
    _
  $region27: #{ensemble_four.1} parent=0 // pred_check_branch
    %743 = sbr.rel (0) target = $region29
  $region28: #{ensemble_four.1} parent=0 // pred_region
    _
  $region29: #{ensemble_four.1} parent=0 // pred_fallthru
    _

</llo_original>
